<compile_context>
chip_gen: v7x
topology: tpu7x:2x2x1
jax: 0.10.0
libtpu: 0.0.40
codegen_flags: <defaults>
</compile_context>

<pallas_src>
import functools

import jax
import jax.numpy as jnp
import numpy as np
from jax.experimental import pallas as pl
from jax.experimental.pallas import tpu as pltpu


def _copy_kernel(x_ref, o_ref):
    # Pure identity copy on a lane-dense 2D block; the flatten itself is a
    # metadata-only reshape in the wrapper (before / after pallas_call).
    o_ref[...] = x_ref[...]


def _flattened_shape(shape, start_dim, end_dim):
    end_dim = end_dim if end_dim >= 0 else len(shape) + end_dim
    left = tuple(shape[:start_dim])
    middle = functools.reduce(lambda a, b: a * b, shape[start_dim:end_dim + 1], 1)
    right = tuple(shape[end_dim + 1:])
    return left + (int(middle),) + right


def _lane_dense_2d(n_elems, max_cols=2048):
    """Factor n_elems into (rows, cols) with cols a multiple of 128.

    Returns None if n_elems is not a multiple of 128; the caller then uses a
    metadata-only reshape instead of a masked, sublane-sparse Pallas tile.
    """
    if n_elems <= 0 or n_elems % 128 != 0:
        return None
    c = 128
    while c * 2 <= max_cols and n_elems % (c * 2) == 0:
        c *= 2
    return n_elems // c, c


def _pick_tile_rows(rows, cols, itemsize, packing, target_block_bytes):
    """Pick block rows near the byte target, multiple of the sublane packing,
    preferring an exact divisor of `rows` so the last block is unmasked."""
    tm = max(packing, target_block_bytes // max(1, cols * itemsize))
    tm = (tm // packing) * packing
    tm = min(tm, rows)
    if rows <= packing or tm >= rows:
        return rows  # block == full row extent (always legal)
    d = tm
    while d >= packing:
        if rows % d == 0:
            return d
        d -= packing
    return tm  # no nice divisor: last block padded/masked by Pallas (legal)


def flatten(x: jax.Array, start_dim: int = 1, end_dim: int = -1,
            use_pallas: bool = False) -> jax.Array:
    """Pallas equivalent of the PyTorch Flatten module's forward pass.

    Default path is a metadata-only jnp.reshape (optimal: flatten on a
    contiguous array moves no data).  Pass use_pallas=True only when this
    copy serves as a fusion anchor for adjacent work.
    """
    in_shape = tuple(x.shape)
    out_shape = _flattened_shape(in_shape, start_dim, end_dim)

    if not use_pallas:
        return jnp.reshape(x, out_shape)

    n_elems = int(np.prod(in_shape)) if in_shape else 1
    factored = _lane_dense_2d(n_elems)
    if factored is None:
        # Non-128-divisible element count: a Pallas copy would need padded /
        # masked stores for zero benefit — fall back to the free reshape.
        return jnp.reshape(x, out_shape)

    rows, cols = factored
    itemsize = jnp.dtype(x.dtype).itemsize
    # Sublane packing multiple: 8 for 32-bit, 16 for bf16/fp16, 32 for int8.
    packing = max(8, 32 // itemsize)

    # ~8 MiB blocks: in+out double-buffered footprint ≈ 32 MiB (fits v7x's
    # 64 MiB physical VMEM); per-grid-step overhead drops below ~3%.
    target_block_bytes = 8 * 1024 * 1024
    tm = _pick_tile_rows(rows, cols, itemsize, packing, target_block_bytes)

    block_bytes = tm * cols * itemsize
    # Explicit scoped-VMEM limit for the double-buffered in+out pipeline
    # (v5e default is only 16 MiB); capped at v7x's 64 MiB physical VMEM.
    vmem_limit = int(min(64 * 1024 * 1024,
                         max(32 * 1024 * 1024, 4 * block_bytes + (4 << 20))))

    n_bytes = n_elems * itemsize
    x2d = jnp.reshape(x, (rows, cols))  # metadata-only on contiguous input

    y2d = pl.pallas_call(
        _copy_kernel,
        out_shape=jax.ShapeDtypeStruct((rows, cols), x.dtype),
        grid=(pl.cdiv(rows, tm),),
        in_specs=[pl.BlockSpec((tm, cols), lambda i: (i, 0))],
        out_specs=pl.BlockSpec((tm, cols), lambda i: (i, 0)),
        compiler_params=pltpu.CompilerParams(
            dimension_semantics=("parallel",),
            vmem_limit_bytes=vmem_limit,
        ),
        cost_estimate=pl.CostEstimate(
            flops=0, transcendentals=0, bytes_accessed=2 * n_bytes),
    )(x2d)

    return jnp.reshape(y2d, out_shape)  # metadata-only


if __name__ == "__main__":
    key = jax.random.PRNGKey(0)
    # Small NCHW input consistent with the CNN-chapter usage of Flatten.
    x = jax.random.normal(key, (2, 4, 16, 16), dtype=jnp.float32)
    y_ref = jnp.reshape(x, (2, 4 * 16 * 16))

    # 1) Exercise the Pallas copy path.
    y = jax.block_until_ready(flatten(x, start_dim=1, end_dim=-1, use_pallas=True))
    assert y.shape == (2, 1024), y.shape
    assert y.dtype == x.dtype
    np.testing.assert_array_equal(np.asarray(y), np.asarray(y_ref))

    # 2) Default (optimal) metadata-only path.
    y_fast = jax.block_until_ready(flatten(x))
    np.testing.assert_array_equal(np.asarray(y_fast), np.asarray(y_ref))

    # 3) Non-128-divisible element count -> robust reshape fallback.
    x_odd = jax.random.normal(key, (2, 3, 5, 7), dtype=jnp.float32)
    y_odd = jax.block_until_ready(flatten(x_odd, use_pallas=True))
    np.testing.assert_array_equal(
        np.asarray(y_odd), np.asarray(jnp.reshape(x_odd, (2, 105))))

    print("KERNEL_OK")
</pallas_src>

<mosaic_0001>
module attributes {stable_mosaic.version = 11 : i64} {
  func.func @_copy_kernel(%arg0: i32, %arg1: memref<1x2048xf32, #tpu.memory_space<vmem>>, %arg2: memref<1x2048xf32, #tpu.memory_space<vmem>>) attributes {dimension_semantics = [#tpu.dimension_semantics<parallel>], iteration_bounds = array<i64: 1>, scalar_prefetch = 0 : i64, scratch_operands = 0 : i64, tpu.core_type = #tpu.core_type<tc>, window_params = [{transform_indices = @transform_0, window_bounds = array<i64: 1, 2048>}, {transform_indices = @transform_1, window_bounds = array<i64: 1, 2048>}]} {
    %c0 = arith.constant 0 : index
    %c0_0 = arith.constant 0 : index
    %0 = vector.load %arg1[%c0, %c0_0] : memref<1x2048xf32, #tpu.memory_space<vmem>>, vector<1x2048xf32>
    %c0_1 = arith.constant 0 : index
    %c0_2 = arith.constant 0 : index
    %1 = vector.load %arg2[%c0_1, %c0_2] : memref<1x2048xf32, #tpu.memory_space<vmem>>, vector<1x2048xf32>
    tpu.vector_store %arg2[%c0_1, %c0_2], %0 {strides = array<i32>} : memref<1x2048xf32, #tpu.memory_space<vmem>>, vector<1x2048xf32>,
    return
  }
  func.func @transform_0(%arg0: i32) -> (i32, i32) {
    %c0_i32 = arith.constant 0 : i32
    %c0_i32_0 = arith.constant 0 : i32
    return %arg0, %c0_i32 : i32, i32
  }
  func.func @transform_1(%arg0: i32) -> (i32, i32) {
    %c0_i32 = arith.constant 0 : i32
    %c0_i32_0 = arith.constant 0 : i32
    return %arg0, %c0_i32 : i32, i32
  }
}

</mosaic_0001>

<llo_original>
// kernel: tpu_custom_call.1
$region0: #{tpu_custom_call.1}
  #allocation0 [shape = 'u32[]', space=smem, size = 0x4, offset = 0x4, fixed_abs, tag = 'smem constant byte address 0x4 - core index']
  #allocation1 [shape = 'u32[144,128]{1,0:T(1,128)}', space=vmem, size = 0x12000, scoped, tag = 'internal scratch']
  %s0 = inlined_call_operand.hbm [shape: f32[1,2048], index: 0, kind: input, shape index: {}]
  %s1 = inlined_call_operand.hbm [shape: f32[1,2048], index: 1, kind: output, shape index: {}]
  %s2 = sld [smem:[#allocation0]]
  $region18: #{tpu_custom_call.1} parent=0
    _
  %s4 = ssub.s32 1, %s2
  %s5 = scalar_select 0, %s4, %s2
  $region1: #{tpu_custom_call.1} parent=0
    #allocation2 [shape = 'u8[8192]{0}', space=vmem, size = 0x2000, scoped, tag = 'input window, operand 0, single buffered']
    #allocation3 [shape = 's32[1]{0}', space=sflag, size = 0x4, scoped, tag = 'scoped memory for tpu_custom_call.1']
    #allocation4 [shape = 's32[1]{0}', space=sflag, size = 0x4, scoped, tag = 'scoped memory for tpu_custom_call.1']
    #allocation5 [shape = 'u8[8192]{0}', space=vmem, size = 0x2000, scoped, tag = 'output window, operand 0, single buffered']
    %6 = vsyncpa [#allocation3], 0
    %7 = vsyncpa [#allocation4], 0
    // Predicated region
    $region2: #{tpu_custom_call.1} parent=1 // pred_check
      _
    $region3: #{tpu_custom_call.1} parent=1 // pred_check_branch
      %9 = sbr.rel (0) target = $region5
    $region4: #{tpu_custom_call.1} parent=1 // pred_region
      %s11 = ssub.s32 256, 256
      %12 = vsyncadd [#allocation3], %s11
      %s14 = sshll.u32 [#allocation2], 4
      %s15 = int_to_ptr.vmem [resolvable:$true] %s14
      %17 = dma.hbm_to_vmem [thread:$0]  %s0, 256, %s15, [#allocation3]
    $region5: #{tpu_custom_call.1} parent=1 // pred_fallthru
      _
    // Predicated region
    $region6: #{tpu_custom_call.1} parent=1 // pred_check
      _
    $region7: #{tpu_custom_call.1} parent=1 // pred_check_branch
      %19 = sbr.rel (0) target = $region9
    $region8: #{tpu_custom_call.1} parent=1 // pred_region
      %20 = dma.done [#allocation3], 256
    $region9: #{tpu_custom_call.1} parent=1 // pred_fallthru
      _
    %v21 = vld [vmem:[#allocation2] sm:$0xff]
    %v22 = vld [vmem:[#allocation2 + $0x8] sm:$0xff]
    %23 = vst [vmem:[#allocation5] sm:$0xff] %v21
    %24 = vst [vmem:[#allocation5 + $0x8] sm:$0xff] %v22
    // Predicated region
    $region10: #{tpu_custom_call.1} parent=1 // pred_check
      _
    $region11: #{tpu_custom_call.1} parent=1 // pred_check_branch
      %26 = sbr.rel (0) target = $region13
    $region12: #{tpu_custom_call.1} parent=1 // pred_region
      %s28 = ssub.s32 256, 256
      %29 = vsyncadd [#allocation4], %s28
      %s31 = sshll.u32 [#allocation5], 4
      %s32 = int_to_ptr.vmem [resolvable:$true] %s31
      %34 = dma.vmem_to_hbm [thread:$0]  %s32, 256, %s1, [#allocation4]
    $region13: #{tpu_custom_call.1} parent=1 // pred_fallthru
      _
    // Predicated region
    $region14: #{tpu_custom_call.1} parent=1 // pred_check
      _
    $region15: #{tpu_custom_call.1} parent=1 // pred_check_branch
      %36 = sbr.rel (0) target = $region17
    $region16: #{tpu_custom_call.1} parent=1 // pred_region
      %37 = dma.done [#allocation4], 256
    $region17: #{tpu_custom_call.1} parent=1 // pred_fallthru
      _
    %38 = vsyncpa [#allocation3], 1
    %39 = vsyncpa [#allocation4], 1

</llo_original>
